<compile_context>
chip_gen: v5e
topology: v5e:2x2
jax: 0.10.0
libtpu: 0.0.40
codegen_flags: <defaults>
</compile_context>

<pallas_src>
import jax
import jax.numpy as jnp
from jax.experimental import pallas as pl
from jax.experimental.pallas import tpu as pltpu


_SLAB_H = 16    # >= 8 window rows + 2 tap rows, sublane-tile aligned
_SLAB_W = 256   # >= 128 window lanes + 2 tap cols, lane-tile aligned
_WIN_H = 8      # per-tap window (one vreg)
_WIN_W = 128


def _fused_double_conv_kernel(params_ref, x_ref, out_ref, slab_ref):
    """Fused (2x2 o 2x2) -> effective 3x3 valid conv.

    params_ref: SMEM f32[10] = [w1_00, w1_01, w1_10, w1_11, b1,
                                w2_00, w2_01, w2_10, w2_11, b2]
    x_ref:      VMEM f32[4, 4]    raw input image
    out_ref:    VMEM f32[2, 2]    valid output
    slab_ref:   VMEM f32[16, 256] zero-padded working slab (scratch)
    """
    # ---- scalar-unit weight fusion (idle scalar slots; 36 MACs) ------------
    w1_00 = params_ref[0]
    w1_01 = params_ref[1]
    w1_10 = params_ref[2]
    w1_11 = params_ref[3]
    b1 = params_ref[4]
    w2_00 = params_ref[5]
    w2_01 = params_ref[6]
    w2_10 = params_ref[7]
    w2_11 = params_ref[8]
    b2 = params_ref[9]

    # w_eff[p][q] = sum_{a+c=p, b+d=q} w2[c,d] * w1[a,b]   (correlation comp.)
    w00 = w2_00 * w1_00
    w01 = w2_00 * w1_01 + w2_01 * w1_00
    w02 = w2_01 * w1_01
    w10 = w2_00 * w1_10 + w2_10 * w1_00
    w11 = w2_00 * w1_11 + w2_01 * w1_10 + w2_10 * w1_01 + w2_11 * w1_00
    w12 = w2_01 * w1_11 + w2_11 * w1_01
    w20 = w2_10 * w1_10
    w21 = w2_10 * w1_11 + w2_11 * w1_10
    w22 = w2_11 * w1_11
    b_eff = b1 * (w2_00 + w2_01 + w2_10 + w2_11) + b2
    w_eff = ((w00, w01, w02), (w10, w11, w12), (w20, w21, w22))

    # ---- zero-fill slab, place 4x4 image in the top-left corner ------------
    slab_ref[...] = jnp.zeros_like(slab_ref)
    slab_ref[0:4, 0:4] = x_ref[...]

    # ---- 9-tap pass: 3 independent partial accumulators (one per tap row) --
    rows = []
    for p in range(3):
        r = w_eff[p][0] * slab_ref[p:p + _WIN_H, 0:_WIN_W]
        r = r + w_eff[p][1] * slab_ref[p:p + _WIN_H, 1:1 + _WIN_W]
        r = r + w_eff[p][2] * slab_ref[p:p + _WIN_H, 2:2 + _WIN_W]
        rows.append(r)
    acc = (rows[0] + rows[1]) + rows[2] + b_eff

    # ---- store only the valid 2x2 result ------------------------------------
    out_ref[...] = acc[0:2, 0:2]


@jax.jit
def double_conv(x_nchw, w1, b1, w2, b2):
    """x_nchw: (1,1,4,4) f32; w*: (2,2) f32; b*: (1,) f32 -> (1,1,2,2) f32."""
    # Flat SMEM parameter block: raw conv params, fused inside the kernel.
    params = jnp.concatenate([
        jnp.reshape(w1, (4,)), jnp.reshape(b1, (1,)),
        jnp.reshape(w2, (4,)), jnp.reshape(b2, (1,)),
    ]).astype(jnp.float32)
    x44 = jnp.reshape(x_nchw, (4, 4)).astype(jnp.float32)

    out22 = pl.pallas_call(
        _fused_double_conv_kernel,
        out_shape=jax.ShapeDtypeStruct((2, 2), jnp.float32),
        in_specs=[
            pl.BlockSpec(memory_space=pltpu.MemorySpace.SMEM),   # params f32[10]
            pl.BlockSpec(memory_space=pltpu.MemorySpace.VMEM),   # image f32[4,4]
        ],
        out_specs=pl.BlockSpec(memory_space=pltpu.MemorySpace.VMEM),
        scratch_shapes=[pltpu.VMEM((_SLAB_H, _SLAB_W), jnp.float32)],
        cost_estimate=pl.CostEstimate(
            flops=2 * 9 * _WIN_H * _WIN_W + 2 * 36,   # padded-slab VPU work + scalar fusion
            transcendentals=0,
            bytes_accessed=(16 + 10 + 4) * 4,         # 4x4 in + 10 params + 2x2 out
        ),
    )(params, x44)

    return out22.reshape(1, 1, 2, 2)


def _reference(x_nchw, w1, b1, w2, b2):
    # Pure-JAX unfused reference (two sequential 2x2 valid cross-correlations).
    def conv(a, w, b):
        H, W = a.shape
        return (w[0, 0] * a[0:H - 1, 0:W - 1] + w[0, 1] * a[0:H - 1, 1:W]
                + w[1, 0] * a[1:H, 0:W - 1] + w[1, 1] * a[1:H, 1:W] + b[0])
    y = conv(conv(x_nchw.reshape(4, 4), w1, b1), w2, b2)
    return y.reshape(1, 1, 2, 2)


if __name__ == "__main__":
    key = jax.random.PRNGKey(0)
    kx, k1, k2, k3, k4 = jax.random.split(key, 5)

    # Input (NCHW), matching torch.randn(1, 1, 4, 4)
    x = jax.random.normal(kx, (1, 1, 4, 4), dtype=jnp.float32)

    # Conv2d(1, 1, 2) params: weight (1,1,2,2) -> (2,2), bias (1,).
    # PyTorch default init is U(-1/sqrt(fan_in), 1/sqrt(fan_in)), fan_in = 4.
    bound = 0.5
    w1 = jax.random.uniform(k1, (2, 2), jnp.float32, -bound, bound)
    b1 = jax.random.uniform(k2, (1,), jnp.float32, -bound, bound)
    w2 = jax.random.uniform(k3, (2, 2), jnp.float32, -bound, bound)
    b2 = jax.random.uniform(k4, (1,), jnp.float32, -bound, bound)

    out = double_conv(x, w1, b1, w2, b2)
    out = jax.block_until_ready(out)

    ref = _reference(x, w1, b1, w2, b2)
    assert out.shape == (1, 1, 2, 2)
    assert jnp.allclose(out, ref, atol=1e-5, rtol=1e-5)

    print("KERNEL_OK")
</pallas_src>

<mosaic_0001>
module attributes {stable_mosaic.version = 11 : i64} {
  func.func @_fused_double_conv_kernel(%arg0: memref<10xf32, #tpu.memory_space<smem>>, %arg1: memref<4x4xf32, #tpu.memory_space<vmem>>, %arg2: memref<2x2xf32, #tpu.memory_space<vmem>>, %arg3: memref<16x256xf32, #tpu.memory_space<vmem>>) attributes {dimension_semantics = [], scalar_prefetch = 0 : i64, scratch_operands = 1 : i64, tpu.core_type = #tpu.core_type<tc>} {
    %c0 = arith.constant 0 : index
    %0 = memref.load %arg0[%c0] : memref<10xf32, #tpu.memory_space<smem>>
    %c1 = arith.constant 1 : index
    %1 = memref.load %arg0[%c1] : memref<10xf32, #tpu.memory_space<smem>>
    %c2 = arith.constant 2 : index
    %2 = memref.load %arg0[%c2] : memref<10xf32, #tpu.memory_space<smem>>
    %c3 = arith.constant 3 : index
    %3 = memref.load %arg0[%c3] : memref<10xf32, #tpu.memory_space<smem>>
    %c4 = arith.constant 4 : index
    %4 = memref.load %arg0[%c4] : memref<10xf32, #tpu.memory_space<smem>>
    %c5 = arith.constant 5 : index
    %5 = memref.load %arg0[%c5] : memref<10xf32, #tpu.memory_space<smem>>
    %c6 = arith.constant 6 : index
    %6 = memref.load %arg0[%c6] : memref<10xf32, #tpu.memory_space<smem>>
    %c7 = arith.constant 7 : index
    %7 = memref.load %arg0[%c7] : memref<10xf32, #tpu.memory_space<smem>>
    %c8 = arith.constant 8 : index
    %8 = memref.load %arg0[%c8] : memref<10xf32, #tpu.memory_space<smem>>
    %c9 = arith.constant 9 : index
    %9 = memref.load %arg0[%c9] : memref<10xf32, #tpu.memory_space<smem>>
    %10 = arith.mulf %5, %0 : f32
    %11 = arith.mulf %5, %1 : f32
    %12 = arith.mulf %6, %0 : f32
    %13 = arith.addf %11, %12 : f32
    %14 = arith.mulf %6, %1 : f32
    %15 = arith.mulf %5, %2 : f32
    %16 = arith.mulf %7, %0 : f32
    %17 = arith.addf %15, %16 : f32
    %18 = arith.mulf %5, %3 : f32
    %19 = arith.mulf %6, %2 : f32
    %20 = arith.addf %18, %19 : f32
    %21 = arith.mulf %7, %1 : f32
    %22 = arith.addf %20, %21 : f32
    %23 = arith.mulf %8, %0 : f32
    %24 = arith.addf %22, %23 : f32
    %25 = arith.mulf %6, %3 : f32
    %26 = arith.mulf %8, %1 : f32
    %27 = arith.addf %25, %26 : f32
    %28 = arith.mulf %7, %2 : f32
    %29 = arith.mulf %7, %3 : f32
    %30 = arith.mulf %8, %2 : f32
    %31 = arith.addf %29, %30 : f32
    %32 = arith.mulf %8, %3 : f32
    %33 = arith.addf %5, %6 : f32
    %34 = arith.addf %33, %7 : f32
    %35 = arith.addf %34, %8 : f32
    %36 = arith.mulf %4, %35 : f32
    %37 = arith.addf %36, %9 : f32
    %cst = arith.constant 0.000000e+00 : f32
    %38 = vector.broadcast %cst : f32 to vector<16x256xf32>
    %c0_0 = arith.constant 0 : index
    %c0_1 = arith.constant 0 : index
    %39 = vector.load %arg3[%c0_0, %c0_1] : memref<16x256xf32, #tpu.memory_space<vmem>>, vector<16x256xf32>
    tpu.vector_store %arg3[%c0_0, %c0_1], %38 {strides = array<i32>} : memref<16x256xf32, #tpu.memory_space<vmem>>, vector<16x256xf32>,
    %c0_2 = arith.constant 0 : index
    %c0_3 = arith.constant 0 : index
    %40 = vector.load %arg1[%c0_2, %c0_3] : memref<4x4xf32, #tpu.memory_space<vmem>>, vector<4x4xf32>
    %c0_4 = arith.constant 0 : index
    %c0_5 = arith.constant 0 : index
    %41 = vector.load %arg3[%c0_4, %c0_5] : memref<16x256xf32, #tpu.memory_space<vmem>>, vector<4x4xf32>
    tpu.vector_store %arg3[%c0_4, %c0_5], %40 {strides = array<i32>} : memref<16x256xf32, #tpu.memory_space<vmem>>, vector<4x4xf32>,
    %c0_6 = arith.constant 0 : index
    %c0_7 = arith.constant 0 : index
    %42 = vector.load %arg3[%c0_6, %c0_7] : memref<16x256xf32, #tpu.memory_space<vmem>>, vector<8x128xf32>
    %43 = vector.broadcast %10 : f32 to vector<8x128xf32>
    %44 = arith.mulf %43, %42 : vector<8x128xf32>
    %c0_8 = arith.constant 0 : index
    %c1_9 = arith.constant 1 : index
    %45 = vector.load %arg3[%c0_8, %c1_9] : memref<16x256xf32, #tpu.memory_space<vmem>>, vector<8x128xf32>
    %46 = vector.broadcast %13 : f32 to vector<8x128xf32>
    %47 = arith.mulf %46, %45 : vector<8x128xf32>
    %48 = arith.addf %44, %47 : vector<8x128xf32>
    %c0_10 = arith.constant 0 : index
    %c2_11 = arith.constant 2 : index
    %49 = vector.load %arg3[%c0_10, %c2_11] : memref<16x256xf32, #tpu.memory_space<vmem>>, vector<8x128xf32>
    %50 = vector.broadcast %14 : f32 to vector<8x128xf32>
    %51 = arith.mulf %50, %49 : vector<8x128xf32>
    %52 = arith.addf %48, %51 : vector<8x128xf32>
    %c1_12 = arith.constant 1 : index
    %c0_13 = arith.constant 0 : index
    %53 = vector.load %arg3[%c1_12, %c0_13] : memref<16x256xf32, #tpu.memory_space<vmem>>, vector<8x128xf32>
    %54 = vector.broadcast %17 : f32 to vector<8x128xf32>
    %55 = arith.mulf %54, %53 : vector<8x128xf32>
    %c1_14 = arith.constant 1 : index
    %c1_15 = arith.constant 1 : index
    %56 = vector.load %arg3[%c1_14, %c1_15] : memref<16x256xf32, #tpu.memory_space<vmem>>, vector<8x128xf32>
    %57 = vector.broadcast %24 : f32 to vector<8x128xf32>
    %58 = arith.mulf %57, %56 : vector<8x128xf32>
    %59 = arith.addf %55, %58 : vector<8x128xf32>
    %c1_16 = arith.constant 1 : index
    %c2_17 = arith.constant 2 : index
    %60 = vector.load %arg3[%c1_16, %c2_17] : memref<16x256xf32, #tpu.memory_space<vmem>>, vector<8x128xf32>
    %61 = vector.broadcast %27 : f32 to vector<8x128xf32>
    %62 = arith.mulf %61, %60 : vector<8x128xf32>
    %63 = arith.addf %59, %62 : vector<8x128xf32>
    %c2_18 = arith.constant 2 : index
    %c0_19 = arith.constant 0 : index
    %64 = vector.load %arg3[%c2_18, %c0_19] : memref<16x256xf32, #tpu.memory_space<vmem>>, vector<8x128xf32>
    %65 = vector.broadcast %28 : f32 to vector<8x128xf32>
    %66 = arith.mulf %65, %64 : vector<8x128xf32>
    %c2_20 = arith.constant 2 : index
    %c1_21 = arith.constant 1 : index
    %67 = vector.load %arg3[%c2_20, %c1_21] : memref<16x256xf32, #tpu.memory_space<vmem>>, vector<8x128xf32>
    %68 = vector.broadcast %31 : f32 to vector<8x128xf32>
    %69 = arith.mulf %68, %67 : vector<8x128xf32>
    %70 = arith.addf %66, %69 : vector<8x128xf32>
    %c2_22 = arith.constant 2 : index
    %c2_23 = arith.constant 2 : index
    %71 = vector.load %arg3[%c2_22, %c2_23] : memref<16x256xf32, #tpu.memory_space<vmem>>, vector<8x128xf32>
    %72 = vector.broadcast %32 : f32 to vector<8x128xf32>
    %73 = arith.mulf %72, %71 : vector<8x128xf32>
    %74 = arith.addf %70, %73 : vector<8x128xf32>
    %75 = arith.addf %52, %63 : vector<8x128xf32>
    %76 = arith.addf %75, %74 : vector<8x128xf32>
    %77 = vector.broadcast %37 : f32 to vector<8x128xf32>
    %78 = arith.addf %76, %77 : vector<8x128xf32>
    %79 = vector.extract_strided_slice %78 {offsets = [0, 0], sizes = [2, 2], strides = [1, 1]} : vector<8x128xf32> to vector<2x2xf32>
    %c0_24 = arith.constant 0 : index
    %c0_25 = arith.constant 0 : index
    %80 = vector.load %arg2[%c0_24, %c0_25] : memref<2x2xf32, #tpu.memory_space<vmem>>, vector<2x2xf32>
    tpu.vector_store %arg2[%c0_24, %c0_25], %79 {strides = array<i32>} : memref<2x2xf32, #tpu.memory_space<vmem>>, vector<2x2xf32>,
    return
  }
}

</mosaic_0001>

<llo_original>
// kernel: double_conv.1
$region0: #{double_conv.1}
  #allocation0 [shape = 'u32[]', space=smem, size = 0x4, offset = 0x4, fixed_abs, tag = 'smem constant byte address 0x4 - core index']
  #allocation1 [shape = 'u32[72,128]{1,0:T(1,128)}', space=vmem, size = 0x9000, scoped, tag = 'internal scratch']
  #allocation2 [shape = 'f32[16,256]{1,0:T(8,128)}', space=vmem, size = 0x4000, scoped, tag = 'scratch operand']
  %s0 = inlined_call_operand.vmem [shape: f32[10], index: 0, kind: input, shape index: {}]
  %s1 = inlined_call_operand.vmem [shape: f32[4,4], index: 1, kind: input, shape index: {}]
  %s2 = inlined_call_operand.hbm [shape: f32[2,2], index: 2, kind: output, shape index: {}]
  %s3 = sld [smem:[#allocation0]]
  $region22: #{double_conv.1} parent=0
    _
  %s5 = ssub.s32 1, %s3
  %s6 = scalar_select 0, %s5, %s3
  $region1: #{double_conv.1} parent=0
    #allocation3 [shape = 'u8[512]{0}', space=smem, size = 0x200, scoped, tag = 'input window, operand 0, single buffered']
    #allocation4 [shape = 's32[1]{0}', space=sflag, size = 0x4, scoped, tag = 'scoped memory for double_conv.1']
    #allocation5 [shape = 's32[1]{0}', space=sflag, size = 0x4, scoped, tag = 'scoped memory for double_conv.1']
    #allocation6 [shape = 'u8[1024]{0}', space=vmem, size = 0x400, scoped, tag = 'output window, operand 0, single buffered']
    %7 = vsyncpa [#allocation5], 0
    %8 = vsyncpa [#allocation4], 0
    // Predicated region
    $region2: #{double_conv.1} parent=1 // pred_check
      _
    $region3: #{double_conv.1} parent=1 // pred_check_branch
      %10 = sbr.rel (0) target = $region5
    $region4: #{double_conv.1} parent=1 // pred_region
      %12 = vsyncadd [#allocation5], 0
      %s14 = sshll.u32 %s0, 4
      %s15 = int_to_ptr.vmem [resolvable:$true] %s14
      %17 = dma.vmem_to_smem %s15, 16, [#allocation3], [#allocation5]
    $region5: #{double_conv.1} parent=1 // pred_fallthru
      _
    // Predicated region
    $region6: #{double_conv.1} parent=1 // pred_check
      _
    $region7: #{double_conv.1} parent=1 // pred_check_branch
      %19 = sbr.rel (0) target = $region9
    $region8: #{double_conv.1} parent=1 // pred_region
      _
    $region9: #{double_conv.1} parent=1 // pred_fallthru
      _
    // Predicated region
    $region10: #{double_conv.1} parent=1 // pred_check
      _
    $region11: #{double_conv.1} parent=1 // pred_check_branch
      %21 = sbr.rel (0) target = $region13
    $region12: #{double_conv.1} parent=1 // pred_region
      %23 = dma.done [#allocation5], 16
    $region13: #{double_conv.1} parent=1 // pred_fallthru
      _
    %24 = sfence
    %s25 = sld [smem:[#allocation3]]
    %s26 = sld [smem:[#allocation3 + $0x1]]
    %s27 = sld [smem:[#allocation3 + $0x2]]
    %s28 = sld [smem:[#allocation3 + $0x3]]
    %s29 = sld [smem:[#allocation3 + $0x4]]
    %s30 = sld [smem:[#allocation3 + $0x5]]
    %s31 = sld [smem:[#allocation3 + $0x6]]
    %s32 = sld [smem:[#allocation3 + $0x7]]
    %s33 = sld [smem:[#allocation3 + $0x8]]
    %s34 = sld [smem:[#allocation3 + $0x9]]
    %s35 = smul.f32 %s30, %s25
    %s36 = smul.f32 %s30, %s26
    %s37 = smul.f32 %s31, %s25
    %s38 = sadd.f32 %s36, %s37
    %s39 = smul.f32 %s31, %s26
    %s40 = smul.f32 %s30, %s27
    %s41 = smul.f32 %s32, %s25
    %s42 = sadd.f32 %s40, %s41
    %s43 = smul.f32 %s30, %s28
    %s44 = smul.f32 %s31, %s27
    %s45 = sadd.f32 %s43, %s44
    %s46 = smul.f32 %s32, %s26
    %s47 = sadd.f32 %s45, %s46
    %s48 = smul.f32 %s33, %s25
    %s49 = sadd.f32 %s47, %s48
    %s50 = smul.f32 %s31, %s28
    %s51 = smul.f32 %s33, %s26
    %s52 = sadd.f32 %s50, %s51
    %s53 = smul.f32 %s32, %s27
    %s54 = smul.f32 %s32, %s28
    %s55 = smul.f32 %s33, %s27
    %s56 = sadd.f32 %s54, %s55
    %s57 = smul.f32 %s33, %s28
    %s58 = sadd.f32 %s30, %s31
    %s59 = sadd.f32 %s58, %s32
    %s60 = sadd.f32 %s59, %s33
    %s61 = smul.f32 %s29, %s60
    %s62 = sadd.f32 %s61, %s34
    %63 = vst [vmem:[#allocation2] sm:$0xff] 0.0
    %64 = vst [vmem:[#allocation2 + $0x8] sm:$0xff] 0.0
    %65 = vst [vmem:[#allocation2 + $0x10] sm:$0xff] 0.0
    %66 = vst [vmem:[#allocation2 + $0x18] sm:$0xff] 0.0
    %v67 = vld [vmem:[%s1] sm:$0xf]
    %vm68 = vcmask 27648
    %69 = vst.msk [vmem:[#allocation2] sm:$0xf] %vm68, %v67
    %v70 = vld [vmem:[#allocation2] sm:$0xff]
    %v71 = vstv %s35
    %v72 = vmul.f32 %v71, %v70
    %v73 = vld [vmem:[#allocation2 + $0x8] sm:$0xff]
    %v74 = vstv %s38
    %v75 = vmul.f32 %v74, %v70
    %v76 = vmul.f32 %v74, %v73
    %79 = vrot.lane.b32.xlu0 %v75, 127
    %v80 = vpop.permute.xlu0 %79
    %81 = vrot.lane.b32.xlu0 %v76, 127
    %v82 = vpop.permute.xlu0 %81
    %vm83 = vcmask 1039360
    %v84 = vsel %vm83, %v80, %v82
    %v86 = vadd.f32 %v72, %v84
    %v87 = vstv %s39
    %v88 = vmul.f32 %v87, %v70
    %v89 = vmul.f32 %v87, %v73
    %92 = vrot.lane.b32.xlu0 %v88, 126
    %v93 = vpop.permute.xlu0 %92
    %94 = vrot.lane.b32.xlu0 %v89, 126
    %v95 = vpop.permute.xlu0 %94
    %vm96 = vcmask 1031168
    %v97 = vsel %vm96, %v93, %v95
    %v99 = vadd.f32 %v86, %v97
    %v100 = vld [vmem:[#allocation2] sm:$0xfe]
    %v101 = vld [vmem:[#allocation2 + $0x10] sm:$0x1]
    %v102 = vstv %s42
    %v103 = vmul.f32 %v102, %v100
    %v104 = vmul.f32 %v102, %v101
    %v105 = vld [vmem:[#allocation2] sm:$0xfe]
    %v106 = vld [vmem:[#allocation2 + $0x8] sm:$0xfe]
    %v107 = vld [vmem:[#allocation2 + $0x10] sm:$0x1]
    %v108 = vld [vmem:[#allocation2 + $0x18] sm:$0x1]
    %v109 = vstv %s49
    %v110 = vmul.f32 %v109, %v105
    %v111 = vmul.f32 %v109, %v106
    %v112 = vmul.f32 %v109, %v107
    %v113 = vmul.f32 %v109, %v108
    %118 = vrot.lane.b32.xlu0 %v110, 127
    %v119 = vpop.permute.xlu0 %118
    %120 = vrot.lane.b32.xlu0 %v111, 127
    %v121 = vpop.permute.xlu0 %120
    %122 = vrot.lane.b32.xlu0 %v112, 127
    %v123 = vpop.permute.xlu0 %122
    %124 = vrot.lane.b32.xlu0 %v113, 127
    %v125 = vpop.permute.xlu0 %124
    %v126 = vsel %vm83, %v119, %v121
    %v127 = vsel %vm83, %v123, %v125
    %v130 = vadd.f32 %v103, %v126
    %v131 = vadd.f32 %v104, %v127
    %v132 = vstv %s52
    %v133 = vmul.f32 %v132, %v105
    %v134 = vmul.f32 %v132, %v106
    %v135 = vmul.f32 %v132, %v107
    %v136 = vmul.f32 %v132, %v108
    %141 = vrot.lane.b32.xlu0 %v133, 126
    %v142 = vpop.permute.xlu0 %141
    %143 = vrot.lane.b32.xlu0 %v134, 126
    %v144 = vpop.permute.xlu0 %143
    %145 = vrot.lane.b32.xlu0 %v135, 126
    %v146 = vpop.permute.xlu0 %145
    %147 = vrot.lane.b32.xlu0 %v136, 126
    %v148 = vpop.permute.xlu0 %147
    %v149 = vsel %vm96, %v142, %v144
    %v150 = vsel %vm96, %v146, %v148
    %v153 = vadd.f32 %v130, %v149
    %v154 = vadd.f32 %v131, %v150
    %v155 = vld [vmem:[#allocation2] sm:$0xfc]
    %v156 = vld [vmem:[#allocation2 + $0x10] sm:$0x3]
    %v157 = vstv %s53
    %v158 = vmul.f32 %v157, %v155
    %v159 = vmul.f32 %v157, %v156
    %v160 = vld [vmem:[#allocation2] sm:$0xfc]
    %v161 = vld [vmem:[#allocation2 + $0x8] sm:$0xfc]
    %v162 = vld [vmem:[#allocation2 + $0x10] sm:$0x3]
    %v163 = vld [vmem:[#allocation2 + $0x18] sm:$0x3]
    %v164 = vstv %s56
    %v165 = vmul.f32 %v164, %v160
    %v166 = vmul.f32 %v164, %v161
    %v167 = vmul.f32 %v164, %v162
    %v168 = vmul.f32 %v164, %v163
    %173 = vrot.lane.b32.xlu0 %v165, 127
    %v174 = vpop.permute.xlu0 %173
    %175 = vrot.lane.b32.xlu0 %v166, 127
    %v176 = vpop.permute.xlu0 %175
    %177 = vrot.lane.b32.xlu0 %v167, 127
    %v178 = vpop.permute.xlu0 %177
    %179 = vrot.lane.b32.xlu0 %v168, 127
    %v180 = vpop.permute.xlu0 %179
    %v181 = vsel %vm83, %v174, %v176
    %v182 = vsel %vm83, %v178, %v180
    %v185 = vadd.f32 %v158, %v181
    %v186 = vadd.f32 %v159, %v182
    %v187 = vstv %s57
    %v188 = vmul.f32 %v187, %v160
    %v189 = vmul.f32 %v187, %v161
    %v190 = vmul.f32 %v187, %v162
    %v191 = vmul.f32 %v187, %v163
    %196 = vrot.lane.b32.xlu0 %v188, 126
    %v197 = vpop.permute.xlu0 %196
    %198 = vrot.lane.b32.xlu0 %v189, 126
    %v199 = vpop.permute.xlu0 %198
    %200 = vrot.lane.b32.xlu0 %v190, 126
    %v201 = vpop.permute.xlu0 %200
    %202 = vrot.lane.b32.xlu0 %v191, 126
    %v203 = vpop.permute.xlu0 %202
    %v204 = vsel %vm96, %v197, %v199
    %v205 = vsel %vm96, %v201, %v203
    %v208 = vadd.f32 %v185, %v204
    %v209 = vadd.f32 %v186, %v205
    %vm212 = vcmask 1046528
    %v213 = vrot.slane %v153, 1
    %v214 = vrot.slane %v154, 1
    %v215 = vsel %vm212, %v213, %v214
    %v217 = vadd.f32 %v99, %v215
    %vm220 = vcmask 1045504
    %v221 = vrot.slane %v208, 2
    %v222 = vrot.slane %v209, 2
    %v223 = vsel %vm220, %v221, %v222
    %v225 = vadd.f32 %v217, %v223
    %v226 = vstv %s62
    %v227 = vadd.f32 %v225, %v226
    %vm228 = vcmask 9216
    %229 = vst.msk [vmem:[#allocation6] sm:$0x3] %vm228, %v227
    // Predicated region
    $region14: #{double_conv.1} parent=1 // pred_check
      _
    $region15: #{double_conv.1} parent=1 // pred_check_branch
      %231 = sbr.rel (0) target = $region17
    $region16: #{double_conv.1} parent=1 // pred_region
      %233 = vsyncadd [#allocation4], 0
      %s235 = sshll.u32 [#allocation6], 4
      %s236 = int_to_ptr.vmem [resolvable:$true] %s235
      %s237 = sshll.u32 %s2, 4
      %s238 = int_to_ptr.hbm [resolvable:$true] %s237
      %240 = dma.vmem_to_hbm [thread:$0]  %s236, 32, %s238, [#allocation4]
    $region17: #{double_conv.1} parent=1 // pred_fallthru
      _
    // Predicated region
    $region18: #{double_conv.1} parent=1 // pred_check
      _
    $region19: #{double_conv.1} parent=1 // pred_check_branch
      %242 = sbr.rel (0) target = $region21
    $region20: #{double_conv.1} parent=1 // pred_region
      %244 = dma.done [#allocation4], 32
    $region21: #{double_conv.1} parent=1 // pred_fallthru
      _
    %245 = vsyncpa [#allocation4], 1
    %246 = vsyncpa [#allocation5], 1

</llo_original>
